<compile_context>
chip_gen: v5e
topology: v5e:2x2
jax: 0.10.0
libtpu: 0.0.40
codegen_flags: <defaults>
</compile_context>

<pallas_src>
import functools
import numpy as np
import jax
import jax.numpy as jnp
from jax import lax
from jax.experimental import pallas as pl
from jax.experimental.pallas import tpu as pltpu

BN_EPS = 1e-5


def _tile_m(M):
    """Row-tile size: prefer 256-512 rows and >=2 grid steps; full M otherwise."""
    if M <= 256:
        return M
    for tm in (512, 256, 128, 64, 32, 16, 8):
        if M % tm == 0 and M // tm >= 2:
            return tm
    return M


def _fold_bn(p):
    """Fold BN(eval) into the conv weight columns; return (bf16 weight, f32 bias)."""
    scale = p["gamma"] / jnp.sqrt(p["var"] + BN_EPS)
    bias = (p["beta"] - p["mean"] * scale).astype(jnp.float32).reshape(1, -1)
    w = (p["w"] * scale[None, :]).astype(jnp.bfloat16)
    return w, bias


# --------------------------- Pallas kernels ---------------------------------

def _mm_kernel(x_ref, w_ref, b_ref, o_ref, *, relu):
    y = jnp.dot(x_ref[...], w_ref[...], preferred_element_type=jnp.float32) + b_ref[...]
    if relu:
        y = jnp.maximum(y, 0.0)
    o_ref[...] = y.astype(o_ref.dtype)


def _mm_res_kernel(x_ref, w_ref, b_ref, id_ref, o_ref):
    # conv3 + bn3 + residual add + ReLU fused.
    y = (jnp.dot(x_ref[...], w_ref[...], preferred_element_type=jnp.float32)
         + b_ref[...] + id_ref[...].astype(jnp.float32))
    o_ref[...] = jnp.maximum(y, 0.0).astype(o_ref.dtype)


def _mm_ds_kernel(x_ref, w_ref, b_ref, id_ref, wd_ref, bd_ref, o_ref):
    # conv3 + bn3 + (downsample 1x1 conv + bn) + residual add + ReLU fused.
    y = (jnp.dot(x_ref[...], w_ref[...], preferred_element_type=jnp.float32) + b_ref[...]
         + jnp.dot(id_ref[...], wd_ref[...], preferred_element_type=jnp.float32)
         + bd_ref[...])
    o_ref[...] = jnp.maximum(y, 0.0).astype(o_ref.dtype)


def _conv3x3_kernel(xp_ref, w_ref, b_ref, o_ref, acc_ref, *, n_img, H, W, relu):
    """3x3 / stride 1 / pad 1 conv as 9 shifted matmuls, fully in VMEM.

    xp_ref : (N, (H+2)*W + 2, Cin) bf16 -- H zero-padded, flattened rows, one
             guard row at each end of every image.
    w_ref  : (9, Cin, Cout) bf16 (BN folded), tap index t = kh*3 + kw.
    o_ref  : (N, H*W, Cout) bf16.
    """
    HW = H * W
    wcol = lax.broadcasted_iota(jnp.int32, (HW, 1), 0) % W
    not_left = wcol != 0          # taps reading column w-1 are invalid at w == 0
    not_right = wcol != (W - 1)   # taps reading column w+1 are invalid at w == W-1

    for n in range(n_img):
        acc_ref[...] = jnp.zeros_like(acc_ref)
        for di in range(3):
            for dj in range(3):
                start = di * W + dj   # contiguous row window for this tap
                a = xp_ref[n, pl.ds(start, HW), :]
                if dj == 0:
                    a = jnp.where(not_left, a, jnp.zeros_like(a))
                elif dj == 2:
                    a = jnp.where(not_right, a, jnp.zeros_like(a))
                acc_ref[...] += jnp.dot(a, w_ref[di * 3 + dj],
                                        preferred_element_type=jnp.float32)
        y = acc_ref[...] + b_ref[...]
        if relu:
            y = jnp.maximum(y, 0.0)
        o_ref[n] = y.astype(o_ref.dtype)


def _avg4_kernel(a_ref, b_ref, c_ref, d_ref, o_ref):
    s = (a_ref[...].astype(jnp.float32) + b_ref[...].astype(jnp.float32)
         + c_ref[...].astype(jnp.float32) + d_ref[...].astype(jnp.float32))
    o_ref[...] = (0.25 * s).astype(o_ref.dtype)


# --------------------------- conv wrappers -----------------------------------

def matmul_bn(xm, w, b, relu):
    """(M,K) bf16 @ (K,N) bf16 + bias [+ ReLU], f32 accumulation, bf16 out."""
    M, K = xm.shape
    Cout = w.shape[1]
    TM = _tile_m(M)
    return pl.pallas_call(
        functools.partial(_mm_kernel, relu=relu),
        out_shape=jax.ShapeDtypeStruct((M, Cout), jnp.bfloat16),
        grid=(M // TM,),
        in_specs=[pl.BlockSpec((TM, K), lambda i: (i, 0)),
                  pl.BlockSpec((K, Cout), lambda i: (0, 0)),
                  pl.BlockSpec((1, Cout), lambda i: (0, 0))],
        out_specs=pl.BlockSpec((TM, Cout), lambda i: (i, 0)),
        compiler_params=pltpu.CompilerParams(dimension_semantics=("parallel",)),
    )(xm, w, b)


def conv1x1_bn_act(x, p, relu):
    N_, H_, W_, Cin = x.shape
    w, b = _fold_bn(p)
    out = matmul_bn(x.reshape(-1, Cin), w, b, relu)
    return out.reshape(N_, H_, W_, -1)


def conv1x1_bn_add_relu(x, p, identity):
    """conv3 + bn3 + residual + ReLU fused (no downsample)."""
    N_, H_, W_, Cin = x.shape
    M = N_ * H_ * W_
    w, b = _fold_bn(p)
    Cout = w.shape[1]
    TM = _tile_m(M)
    out = pl.pallas_call(
        _mm_res_kernel,
        out_shape=jax.ShapeDtypeStruct((M, Cout), jnp.bfloat16),
        grid=(M // TM,),
        in_specs=[pl.BlockSpec((TM, Cin), lambda i: (i, 0)),
                  pl.BlockSpec((Cin, Cout), lambda i: (0, 0)),
                  pl.BlockSpec((1, Cout), lambda i: (0, 0)),
                  pl.BlockSpec((TM, Cout), lambda i: (i, 0))],
        out_specs=pl.BlockSpec((TM, Cout), lambda i: (i, 0)),
        compiler_params=pltpu.CompilerParams(dimension_semantics=("parallel",)),
    )(x.reshape(M, Cin), w, b, identity.reshape(M, Cout))
    return out.reshape(N_, H_, W_, Cout)


def conv1x1_bn_downsample_add_relu(x, p3, identity, pds):
    """relu( x @ W3 + b3 + identity @ Wd + bd ) -- conv3 + downsample + add fused."""
    N_, H_, W_, Cin = x.shape
    M = N_ * H_ * W_
    w3, b3 = _fold_bn(p3)
    wd, bd = _fold_bn(pds)
    Cout = w3.shape[1]
    Cid = identity.shape[-1]
    TM = _tile_m(M)
    out = pl.pallas_call(
        _mm_ds_kernel,
        out_shape=jax.ShapeDtypeStruct((M, Cout), jnp.bfloat16),
        grid=(M // TM,),
        in_specs=[pl.BlockSpec((TM, Cin), lambda i: (i, 0)),
                  pl.BlockSpec((Cin, Cout), lambda i: (0, 0)),
                  pl.BlockSpec((1, Cout), lambda i: (0, 0)),
                  pl.BlockSpec((TM, Cid), lambda i: (i, 0)),
                  pl.BlockSpec((Cid, Cout), lambda i: (0, 0)),
                  pl.BlockSpec((1, Cout), lambda i: (0, 0))],
        out_specs=pl.BlockSpec((TM, Cout), lambda i: (i, 0)),
        compiler_params=pltpu.CompilerParams(dimension_semantics=("parallel",)),
    )(x.reshape(M, Cin), w3, b3, identity.reshape(M, Cid), wd, bd)
    return out.reshape(N_, H_, W_, Cout)


def conv3x3_bn_act(x, p, relu):
    """3x3 / stride 1 / pad 1 conv + BN [+ ReLU] without HBM im2col."""
    N_, H_, W_, Cin = x.shape
    w, b = _fold_bn(p)                       # (9*Cin, Cout), (1, Cout)
    Cout = w.shape[1]
    w9 = w.reshape(9, Cin, Cout)
    # pad H, flatten rows, add one guard row at each end of every image.
    xp = jnp.pad(x, ((0, 0), (1, 1), (0, 0), (0, 0)))
    xp = xp.reshape(N_, (H_ + 2) * W_, Cin)
    xp = jnp.pad(xp, ((0, 0), (1, 1), (0, 0)))
    HW = H_ * W_
    kern = functools.partial(_conv3x3_kernel, n_img=N_, H=H_, W=W_, relu=relu)
    out = pl.pallas_call(
        kern,
        out_shape=jax.ShapeDtypeStruct((N_, HW, Cout), jnp.bfloat16),
        grid=(1,),
        in_specs=[pl.BlockSpec(tuple(xp.shape), lambda i: (0, 0, 0)),
                  pl.BlockSpec((9, Cin, Cout), lambda i: (0, 0, 0)),
                  pl.BlockSpec((1, Cout), lambda i: (0, 0))],
        out_specs=pl.BlockSpec((N_, HW, Cout), lambda i: (0, 0, 0)),
        scratch_shapes=[pltpu.VMEM((HW, Cout), jnp.float32)],
    )(xp, w9, b)
    return out.reshape(N_, H_, W_, Cout)


def im2col(x, k, stride, pad):
    """NHWC -> (N*Ho*Wo, k*k*C) patch matrix, features ordered (kh, kw, cin)."""
    N, H, W, C = x.shape
    if pad > 0:
        x = jnp.pad(x, ((0, 0), (pad, pad), (pad, pad), (0, 0)))
    Ho = (H + 2 * pad - k) // stride + 1
    Wo = (W + 2 * pad - k) // stride + 1
    cols = []
    for di in range(k):
        for dj in range(k):
            cols.append(x[:, di:di + (Ho - 1) * stride + 1:stride,
                          dj:dj + (Wo - 1) * stride + 1:stride, :])
    patches = jnp.concatenate(cols, axis=-1)
    return patches.reshape(N * Ho * Wo, k * k * C), (N, Ho, Wo)


def conv_stem1_bn_relu(x, p):
    """Stem conv1: 3x3, stride 2, pad 1, Cin=3 -- keep im2col (27-wide, negligible)."""
    patches, (N_, Ho, Wo) = im2col(x, 3, 2, 1)
    w, b = _fold_bn(p)
    out = matmul_bn(patches, w, b, relu=True)
    return out.reshape(N_, Ho, Wo, -1)


def avgpool2x2(x):
    """nn.AvgPool2d(2) on NHWC; single lane-dense elementwise Pallas kernel."""
    # TODO(synk): the 2x2 phase gather is still done by XLA strided slices feeding
    # the kernel; folding it into the consumer's DMA would remove one round trip.
    N_, H_, W_, C = x.shape
    Ho, Wo = H_ // 2, W_ // 2
    a = x[:, 0::2, 0::2, :]
    b = x[:, 0::2, 1::2, :]
    c = x[:, 1::2, 0::2, :]
    d = x[:, 1::2, 1::2, :]
    T = N_ * Ho * Wo * C
    if T % 128 == 0:                  # lane-dense layout (avoids masked stores)
        M2, L = T // 128, 128
    else:
        M2, L = N_ * Ho * Wo, C
    TM = _tile_m(M2)
    rs = lambda t: t.reshape(M2, L)
    out = pl.pallas_call(
        _avg4_kernel,
        out_shape=jax.ShapeDtypeStruct((M2, L), x.dtype),
        grid=(M2 // TM,),
        in_specs=[pl.BlockSpec((TM, L), lambda i: (i, 0))] * 4,
        out_specs=pl.BlockSpec((TM, L), lambda i: (i, 0)),
        compiler_params=pltpu.CompilerParams(dimension_semantics=("parallel",)),
    )(rs(a), rs(b), rs(c), rs(d))
    return out.reshape(N_, Ho, Wo, C)


# --------------------------- CLIP Bottleneck ----------------------------------

def bottleneck(x, p, stride):
    out = conv1x1_bn_act(x, p["conv1"], relu=True)
    out = conv3x3_bn_act(out, p["conv2"], relu=True)
    if stride > 1:
        out = avgpool2x2(out)
    if p["downsample"] is not None:
        identity = avgpool2x2(x) if stride > 1 else x
        return conv1x1_bn_downsample_add_relu(out, p["conv3"], identity, p["downsample"])
    return conv1x1_bn_add_relu(out, p["conv3"], x)


def bottleneck_tail(x, p, stride):
    """Unrolled tail exactly as in the PyTorch forward:
    conv1/bn1/act1 -> conv2/bn2/act2 -> avgpool (Identity when stride == 1)."""
    out = conv1x1_bn_act(x, p["conv1"], relu=True)
    out = conv3x3_bn_act(out, p["conv2"], relu=True)
    if stride > 1:
        out = avgpool2x2(out)
    return out


def bottleneck_tail_act3(avgpool_out, p):
    # NOTE: matches the reference forward, which applies conv3/bn3/act3 WITHOUT
    # adding the residual identity.
    return conv1x1_bn_act(avgpool_out, p["conv3"], relu=True)


# --------------------------- full forward ------------------------------------

def forward(params, image_nchw):
    x = jnp.transpose(image_nchw, (0, 2, 3, 1)).astype(jnp.bfloat16)   # NCHW -> NHWC
    # stem
    x = conv_stem1_bn_relu(x, params["conv1"])
    x = conv3x3_bn_act(x, params["conv2"], relu=True)
    x = conv3x3_bn_act(x, params["conv3"], relu=True)
    feats = avgpool2x2(x)                               # image_features

    h = feats
    for blk in params["layer1"]:
        h = bottleneck(h, blk["p"], blk["stride"])

    for blk in params["layer2"][:3]:
        h = bottleneck(h, blk["p"], blk["stride"])
    blk23 = params["layer2"][3]
    out2 = bottleneck_tail(h, blk23["p"], blk23["stride"])   # image_features2_3_avgpool
    h = bottleneck_tail_act3(out2, blk23["p"])

    for blk in params["layer3"][:5]:
        h = bottleneck(h, blk["p"], blk["stride"])
    blk35 = params["layer3"][5]
    out3 = bottleneck_tail(h, blk35["p"], blk35["stride"])   # image_features3_5_avgpool
    h = bottleneck_tail_act3(out3, blk35["p"])

    for blk in params["layer4"][:2]:
        h = bottleneck(h, blk["p"], blk["stride"])
    blk42 = params["layer4"][2]
    out4 = bottleneck_tail(h, blk42["p"], blk42["stride"])   # image_features4_2_avgpool

    to_nchw = lambda t: jnp.transpose(t.astype(jnp.float32), (0, 3, 1, 2))
    return to_nchw(feats), to_nchw(out2), to_nchw(out3), to_nchw(out4)


# --------------------------- deterministic params -----------------------------

def init_conv_bn(key, k, cin, cout):
    kw, kg, kb, km, kv = jax.random.split(key, 5)
    fan_in = k * k * cin
    return dict(
        w=jax.random.normal(kw, (fan_in, cout), jnp.float32) / np.sqrt(fan_in),
        gamma=1.0 + 0.1 * jax.random.normal(kg, (cout,), jnp.float32),
        beta=0.1 * jax.random.normal(kb, (cout,), jnp.float32),
        mean=0.1 * jax.random.normal(km, (cout,), jnp.float32),
        var=0.5 + 0.25 * jax.random.uniform(kv, (cout,), jnp.float32),
    )


def init_bottleneck(key, inplanes, planes, stride):
    k1, k2, k3, kd = jax.random.split(key, 4)
    p = dict(
        conv1=init_conv_bn(k1, 1, inplanes, planes),
        conv2=init_conv_bn(k2, 3, planes, planes),
        conv3=init_conv_bn(k3, 1, planes, planes * 4),
        downsample=None,
    )
    if stride > 1 or inplanes != planes * 4:
        p["downsample"] = init_conv_bn(kd, 1, inplanes, planes * 4)
    return dict(p=p, stride=stride)


def init_layer(key, inplanes, planes, blocks, stride):
    keys = jax.random.split(key, blocks)
    layer = [init_bottleneck(keys[0], inplanes, planes, stride)]
    for i in range(1, blocks):
        layer.append(init_bottleneck(keys[i], planes * 4, planes, 1))
    return layer, planes * 4


def init_params(key, width=16):
    ks = jax.random.split(key, 7)
    params = dict(
        conv1=init_conv_bn(ks[0], 3, 3, width // 2),
        conv2=init_conv_bn(ks[1], 3, width // 2, width // 2),
        conv3=init_conv_bn(ks[2], 3, width // 2, width),
    )
    layers = (3, 4, 6, 3)                                   # RN50 block counts
    l1, c = init_layer(ks[3], width, width, layers[0], 1)
    l2, c = init_layer(ks[4], c, width * 2, layers[1], 2)
    l3, c = init_layer(ks[5], c, width * 4, layers[2], 2)
    l4, c = init_layer(ks[6], c, width * 8, layers[3], 2)
    params.update(layer1=l1, layer2=l2, layer3=l3, layer4=l4)
    return params


if __name__ == "__main__":
    key = jax.random.PRNGKey(0)
    pkey, xkey = jax.random.split(key)
    width = 16                                  # scaled-down CLIP RN50 (real width=64)
    params = init_params(pkey, width=width)
    image = jax.random.normal(xkey, (2, 3, 32, 32), jnp.float32)  # NCHW like PyTorch
    outs = forward(params, image)
    outs = jax.block_until_ready(outs)
    # shapes: (2,16,8,8), (2,32,4,4), (2,64,2,2), (2,128,1,1)
    print("KERNEL_OK")
</pallas_src>

<mosaic_0001>
module attributes {stable_mosaic.version = 11 : i64} {
  func.func @_mm_kernel(%arg0: i32, %arg1: memref<256x27xbf16, #tpu.memory_space<vmem>>, %arg2: memref<27x8xbf16, #tpu.memory_space<vmem>>, %arg3: memref<1x8xf32, #tpu.memory_space<vmem>>, %arg4: memref<256x8xbf16, #tpu.memory_space<vmem>>) attributes {dimension_semantics = [#tpu.dimension_semantics<parallel>], iteration_bounds = array<i64: 2>, scalar_prefetch = 0 : i64, scratch_operands = 0 : i64, tpu.core_type = #tpu.core_type<tc>, window_params = [{transform_indices = @transform_0, window_bounds = array<i64: 256, 27>}, {pipeline_mode = #tpu.pipeline_mode<synchronous>, transform_indices = @transform_1, window_bounds = array<i64: 27, 8>}, {pipeline_mode = #tpu.pipeline_mode<synchronous>, transform_indices = @transform_2, window_bounds = array<i64: 1, 8>}, {transform_indices = @transform_3, window_bounds = array<i64: 256, 8>}]} {
    %c0 = arith.constant 0 : index
    %c0_0 = arith.constant 0 : index
    %0 = vector.load %arg1[%c0, %c0_0] : memref<256x27xbf16, #tpu.memory_space<vmem>>, vector<256x27xbf16>
    %c0_1 = arith.constant 0 : index
    %c0_2 = arith.constant 0 : index
    %1 = vector.load %arg2[%c0_1, %c0_2] : memref<27x8xbf16, #tpu.memory_space<vmem>>, vector<27x8xbf16>
    %cst = arith.constant dense<0.000000e+00> : vector<256x8xf32>
    %2 = tpu.matmul %0, %1, %cst {dimension_numbers = #tpu.dot_dimension_numbers<[1], [0], [0], [1], [0, 0, 1, 1], [], []>} : vector<256x27xbf16>, vector<27x8xbf16>, vector<256x8xf32> -> vector<256x8xf32>
    %c0_3 = arith.constant 0 : index
    %c0_4 = arith.constant 0 : index
    %3 = vector.load %arg3[%c0_3, %c0_4] : memref<1x8xf32, #tpu.memory_space<vmem>>, vector<1x8xf32>
    %4 = vector.broadcast %3 : vector<1x8xf32> to vector<256x8xf32>
    %5 = arith.addf %2, %4 : vector<256x8xf32>
    %cst_5 = arith.constant 0.000000e+00 : f32
    %6 = vector.broadcast %cst_5 : f32 to vector<256x8xf32>
    %7 = arith.maximumf %5, %6 : vector<256x8xf32>
    %8 = arith.truncf %7 : vector<256x8xf32> to vector<256x8xbf16>
    %c0_6 = arith.constant 0 : index
    %c0_7 = arith.constant 0 : index
    %9 = vector.load %arg4[%c0_6, %c0_7] : memref<256x8xbf16, #tpu.memory_space<vmem>>, vector<256x8xbf16>
    tpu.vector_store %arg4[%c0_6, %c0_7], %8 {strides = array<i32>} : memref<256x8xbf16, #tpu.memory_space<vmem>>, vector<256x8xbf16>,
    return
  }
  func.func @transform_0(%arg0: i32) -> (i32, i32) {
    %c0_i32 = arith.constant 0 : i32
    %c0_i32_0 = arith.constant 0 : i32
    return %arg0, %c0_i32 : i32, i32
  }
  func.func @transform_1(%arg0: i32) -> (i32, i32) {
    %c0_i32 = arith.constant 0 : i32
    %c0_i32_0 = arith.constant 0 : i32
    %c0_i32_1 = arith.constant 0 : i32
    return %c0_i32, %c0_i32_0 : i32, i32
  }
  func.func @transform_2(%arg0: i32) -> (i32, i32) {
    %c0_i32 = arith.constant 0 : i32
    %c0_i32_0 = arith.constant 0 : i32
    %c0_i32_1 = arith.constant 0 : i32
    return %c0_i32, %c0_i32_0 : i32, i32
  }
  func.func @transform_3(%arg0: i32) -> (i32, i32) {
    %c0_i32 = arith.constant 0 : i32
    %c0_i32_0 = arith.constant 0 : i32
    return %arg0, %c0_i32 : i32, i32
  }
}

</mosaic_0001>

<llo_original>
// kernel: tpu_custom_call.1
$region0: #{tpu_custom_call.1}
  #allocation0 [shape = 'u32[]', space=smem, size = 0x4, offset = 0x4, fixed_abs, tag = 'smem constant byte address 0x4 - core index']
  #allocation1 [shape = 'u32[72,128]{1,0:T(1,128)}', space=vmem, size = 0x9000, scoped, tag = 'internal scratch']
  %s0 = inlined_call_operand.vmem [shape: bf16[512,27], index: 0, kind: input, shape index: {}]
  %s1 = inlined_call_operand.vmem [shape: bf16[27,8], index: 1, kind: input, shape index: {}]
  %s2 = inlined_call_operand.vmem [shape: f32[1,8], index: 2, kind: input, shape index: {}]
  %s3 = inlined_call_operand.vmem [shape: bf16[512,8], index: 3, kind: output, shape index: {}]
  %s4 = sld [smem:[#allocation0]]
  $region45: #{tpu_custom_call.1} parent=0
    _
  %s6 = ssub.s32 1, %s4
  %s7 = scalar_select 0, %s6, %s4
  loop: start=0, step=1, limit=4
  $region2: #{tpu_custom_call.1} parent=0 // loop_pre_header
    _
  $region3: #{tpu_custom_call.1} parent=0 // loop_header
    %s9 = sphi 0, %s13
    %p10 = scmp.ge.s32.totalorder %s9, 4
    %s19 = sphi 0, %s21
    %s22 = sphi 0, %s19
    %s23 = sphi 0, %s22
    %s39 = sphi 0, %s23
    %s43 = sphi 0, %s43
    %s45 = sphi 0, %s43
    %s46 = sphi 0, %s45
    %s60 = sphi 0, %s46
    %s64 = sphi 0, %s64
    %s66 = sphi 0, %s64
    %s67 = sphi 0, %s66
    %s81 = sphi 0, %s67
    %s87 = sphi 0, %s89
    %s90 = sphi 0, %s87
    %s91 = sphi 0, %s90
    %s107 = sphi 0, %s91
  $region4: #{tpu_custom_call.1} parent=0 // loop_header_branch
    %12 = sbr.rel (%p10) target = $region8
  $region5: #{tpu_custom_call.1} parent=0 // loop_body
    %s14 = ssub.s32 %s9, 1
    %s15 = ssub.s32 %s9, 2
    %s16 = sadd.s32 %s9, 1
    %s17 = ssub.s32 %s9, %s16
    %p18 = scmp.eq.s32.totalorder %s17, 0
    %s20 = sadd.s32 %s19, 1
    %s21 = scalar_select %p18, %s19, %s20
    %p24 = pneg %p18
    %p25 = scmp.eq.s32.totalorder %s9, 1
    %p26 = por %p24, %p25
    %p27 = scmp.ne.s32.totalorder %s19, %s22
    %p28 = scmp.eq.s32.totalorder %s9, 0
    %p29 = por %p27, %p28
    %p30 = scmp.ne.s32.totalorder %s19, %s22
    %p31 = scmp.eq.s32.totalorder %s14, 1
    %p32 = por %p30, %p31
    %p33 = scmp.ne.s32.totalorder %s22, %s23
    %p34 = scmp.eq.s32.totalorder %s14, 0
    %p35 = por %p33, %p34
    %p36 = scmp.ne.s32.totalorder %s22, %s23
    %p37 = scmp.eq.s32.totalorder %s15, 1
    %p38 = por %p36, %p37
    %p40 = scmp.ne.s32.totalorder %s23, %s39
    %p41 = scmp.eq.s32.totalorder %s15, 0
    %p42 = por %p40, %p41
    %s44 = sadd.s32 %s43, 1
    %p47 = scmp.eq.s32.totalorder %s9, 1
    %p48 = scmp.ne.s32.totalorder %s43, %s45
    %p49 = scmp.eq.s32.totalorder %s9, 0
    %p50 = por %p48, %p49
    %p51 = scmp.ne.s32.totalorder %s43, %s45
    %p52 = scmp.eq.s32.totalorder %s14, 1
    %p53 = por %p51, %p52
    %p54 = scmp.ne.s32.totalorder %s45, %s46
    %p55 = scmp.eq.s32.totalorder %s14, 0
    %p56 = por %p54, %p55
    %p57 = scmp.ne.s32.totalorder %s45, %s46
    %p58 = scmp.eq.s32.totalorder %s15, 1
    %p59 = por %p57, %p58
    %p61 = scmp.ne.s32.totalorder %s46, %s60
    %p62 = scmp.eq.s32.totalorder %s15, 0
    %p63 = por %p61, %p62
    %s65 = sadd.s32 %s64, 1
    %p68 = scmp.eq.s32.totalorder %s9, 1
    %p69 = scmp.ne.s32.totalorder %s64, %s66
    %p70 = scmp.eq.s32.totalorder %s9, 0
    %p71 = por %p69, %p70
    %p72 = scmp.ne.s32.totalorder %s64, %s66
    %p73 = scmp.eq.s32.totalorder %s14, 1
    %p74 = por %p72, %p73
    %p75 = scmp.ne.s32.totalorder %s66, %s67
    %p76 = scmp.eq.s32.totalorder %s14, 0
    %p77 = por %p75, %p76
    %p78 = scmp.ne.s32.totalorder %s66, %s67
    %p79 = scmp.eq.s32.totalorder %s15, 1
    %p80 = por %p78, %p79
    %p82 = scmp.ne.s32.totalorder %s67, %s81
    %p83 = scmp.eq.s32.totalorder %s15, 0
    %p84 = por %p82, %p83
    %s85 = ssub.s32 %s9, %s16
    %p86 = scmp.eq.s32.totalorder %s85, 0
    %s88 = sadd.s32 %s87, 1
    %s89 = scalar_select %p86, %s87, %s88
    %p92 = pneg %p86
    %p93 = scmp.eq.s32.totalorder %s9, 1
    %p94 = por %p92, %p93
    %p95 = scmp.ne.s32.totalorder %s87, %s90
    %p96 = scmp.eq.s32.totalorder %s9, 0
    %p97 = por %p95, %p96
    %p98 = scmp.ne.s32.totalorder %s87, %s90
    %p99 = scmp.eq.s32.totalorder %s14, 1
    %p100 = por %p98, %p99
    %p101 = scmp.ne.s32.totalorder %s90, %s91
    %p102 = scmp.eq.s32.totalorder %s14, 0
    %p103 = por %p101, %p102
    %p104 = scmp.ne.s32.totalorder %s90, %s91
    %p105 = scmp.eq.s32.totalorder %s15, 1
    %p106 = por %p104, %p105
    %p108 = scmp.ne.s32.totalorder %s91, %s107
    %p109 = scmp.eq.s32.totalorder %s15, 0
    %p110 = por %p108, %p109
    %p111 = scmp.le.s32.totalorder 1, %s9
    %p112 = scmp.lt.s32.totalorder %s9, 3
    %p113 = pnand %p111, %p112
    %p114 = pneg %p113
    // Predicated region
    $region9: #{tpu_custom_call.1} parent=5 // pred_check
      _
    $region10: #{tpu_custom_call.1} parent=5 // pred_check_branch
      %116 = sbr.rel (%p113) target = $region12
    $region11: #{tpu_custom_call.1} parent=5 // pred_region
      %s117 = ssub.s32 %s9, 1
      // Predicated region
      $region13: #{tpu_custom_call.1} parent=11 // pred_check
        %p118 = pneg %p56
      $region14: #{tpu_custom_call.1} parent=11 // pred_check_branch
        %120 = sbr.rel (%p118) target = $region16
      $region15: #{tpu_custom_call.1} parent=11 // pred_region
        _
      $region16: #{tpu_custom_call.1} parent=11 // pred_fallthru
        _
      // Predicated region
      $region17: #{tpu_custom_call.1} parent=11 // pred_check
        %p121 = pneg %p77
      $region18: #{tpu_custom_call.1} parent=11 // pred_check_branch
        %123 = sbr.rel (%p121) target = $region20
      $region19: #{tpu_custom_call.1} parent=11 // pred_region
        _
      $region20: #{tpu_custom_call.1} parent=11 // pred_fallthru
        _
    $region12: #{tpu_custom_call.1} parent=5 // pred_fallthru
      _
    %p124 = scmp.lt.s32.totalorder %s9, 2
    // Predicated region
    $region21: #{tpu_custom_call.1} parent=5 // pred_check
      %p125 = pneg %p124
    $region22: #{tpu_custom_call.1} parent=5 // pred_check_branch
      %127 = sbr.rel (%p125) target = $region24
    $region23: #{tpu_custom_call.1} parent=5 // pred_region
      // Predicated region
      $region25: #{tpu_custom_call.1} parent=23 // pred_check
        %p128 = pneg %p29
      $region26: #{tpu_custom_call.1} parent=23 // pred_check_branch
        %130 = sbr.rel (%p128) target = $region28
      $region27: #{tpu_custom_call.1} parent=23 // pred_region
        %s131 = smul.u32 32, %s9
        %p132 = scmp.lt.s32.totalorder %s131, 63
        %s133 = scalar_select %p132, %s131, 63
        %s134 = smul.addr %s133, 4
        %s135 = scalar_lea.vmem %s0, %s134
        %s136 = smul.u32 32, %s9
      $region28: #{tpu_custom_call.1} parent=23 // pred_fallthru
        _
    $region24: #{tpu_custom_call.1} parent=5 // pred_fallthru
      _
    %p137 = scmp.le.s32.totalorder 1, %s9
    %p138 = scmp.lt.s32.totalorder %s9, 3
    %p139 = pnand %p137, %p138
    %p140 = pneg %p139
    // Predicated region
    $region29: #{tpu_custom_call.1} parent=5 // pred_check
      _
    $region30: #{tpu_custom_call.1} parent=5 // pred_check_branch
      %142 = sbr.rel (%p139) target = $region32
    $region31: #{tpu_custom_call.1} parent=5 // pred_region
      %s143 = ssub.s32 %s9, 1
      %s144 = smul.u32 32, %s14
      %p145 = scmp.lt.s32.totalorder %s144, 63
      %s146 = scalar_select %p145, %s144, 63
      %s147 = smul.addr %s146, 4
      %s148 = scalar_lea.vmem %s0, %s147
      %p149 = pneg %p35
      %p150 = pneg %p32
      %p151 = pneg %p56
      %p152 = pneg %p53
      %p153 = pneg %p77
      %p154 = pneg %p74
      %p155 = pneg %p103
      %p156 = pneg %p100
      %s157 = smul.u32 32, %s14
      %p158 = scmp.lt.s32.totalorder %s157, 63
      %s159 = scalar_select %p158, %s157, 63
      %s160 = smul.addr %s159, 4
      %s161 = scalar_lea.vmem %s3, %s160
      %s162 = smul.u32 32, %s14
      %p163 = scmp.lt.s32.totalorder %s162, 63
      %s164 = scalar_select %p163, %s162, 63
      %s165 = smul.addr %s164, 4
      %s166 = scalar_lea.vmem %s0, %s165
      %s167 = smul.u32 32, %s14
      %s168 = smul.u32 32, %s14
      %p169 = scmp.lt.s32.totalorder %s168, 63
      %s170 = scalar_select %p169, %s168, 63
      %s171 = smul.addr %s170, 4
      %s172 = scalar_lea.vmem %s3, %s171
      %s173 = smul.u32 32, %s14
      %v175 = vld [vmem:[%s166] sm:$0xf]
      %v176 = vld [vmem:[%s166 + $0x4] sm:$0xf]
      %v177 = vld [vmem:[%s166 + $0x8] sm:$0xf]
      %v178 = vld [vmem:[%s166 + $0xc] sm:$0xf]
      %v179 = vld [vmem:[%s166 + $0x10] sm:$0xf]
      %v180 = vld [vmem:[%s166 + $0x14] sm:$0xf]
      %v181 = vld [vmem:[%s166 + $0x18] sm:$0xf]
      %v182 = vld [vmem:[%s166 + $0x1c] sm:$0xf]
      %v183 = vld [vmem:[%s166 + $0x20] sm:$0xf]
      %v184 = vld [vmem:[%s166 + $0x24] sm:$0xf]
      %v185 = vld [vmem:[%s166 + $0x28] sm:$0xf]
      %v186 = vld [vmem:[%s166 + $0x2c] sm:$0xf]
      %v187 = vld [vmem:[%s166 + $0x30] sm:$0xf]
      %v188 = vld [vmem:[%s166 + $0x34] sm:$0xf]
      %v189 = vld [vmem:[%s166 + $0x38] sm:$0xf]
      %v190 = vld [vmem:[%s166 + $0x3c] sm:$0xf]
      %v191 = vld [vmem:[%s166 + $0x40] sm:$0xf]
      %v192 = vld [vmem:[%s166 + $0x44] sm:$0xf]
      %v193 = vld [vmem:[%s166 + $0x48] sm:$0xf]
      %v194 = vld [vmem:[%s166 + $0x4c] sm:$0xf]
      %v195 = vld [vmem:[%s166 + $0x50] sm:$0xf]
      %v196 = vld [vmem:[%s166 + $0x54] sm:$0xf]
      %v197 = vld [vmem:[%s166 + $0x58] sm:$0xf]
      %v198 = vld [vmem:[%s166 + $0x5c] sm:$0xf]
      %v199 = vld [vmem:[%s166 + $0x60] sm:$0xf]
      %v200 = vld [vmem:[%s166 + $0x64] sm:$0xf]
      %v201 = vld [vmem:[%s166 + $0x68] sm:$0xf]
      %v202 = vld [vmem:[%s166 + $0x6c] sm:$0xf]
      %v203 = vld [vmem:[%s166 + $0x70] sm:$0xf]
      %v204 = vld [vmem:[%s166 + $0x74] sm:$0xf]
      %v205 = vld [vmem:[%s166 + $0x78] sm:$0xf]
      %v206 = vld [vmem:[%s166 + $0x7c] sm:$0xf]
      %v207 = vld [vmem:[%s1] sm:$0xf]
      %v208 = vld [vmem:[%s1 + $0x4] sm:$0xf]
      %v209 = vld [vmem:[%s1 + $0x8] sm:$0xf]
      %v210 = vld [vmem:[%s1 + $0xc] sm:$0x3]
      %v211 = vld [vmem:[%s2] sm:$0x1]
      %v213 = vperm.slane %v211, 0
      %v247 = vunpack.c.l.b16 %v175
      %v248 = vunpack.c.l.b16 %v176
      %v249 = vunpack.c.l.b16 %v177
      %v250 = vunpack.c.l.b16 %v178
      %v251 = vunpack.c.l.b16 %v179
      %v252 = vunpack.c.l.b16 %v180
      %v253 = vunpack.c.l.b16 %v181
      %v254 = vunpack.c.l.b16 %v182
      %v255 = vunpack.c.l.b16 %v183
      %v256 = vunpack.c.l.b16 %v184
      %v257 = vunpack.c.l.b16 %v185
      %v258 = vunpack.c.l.b16 %v186
      %v259 = vunpack.c.l.b16 %v187
      %v260 = vunpack.c.l.b16 %v188
      %v261 = vunpack.c.l.b16 %v189
      %v262 = vunpack.c.l.b16 %v190
      %v263 = vunpack.c.l.b16 %v191
      %v264 = vunpack.c.l.b16 %v192
      %v265 = vunpack.c.l.b16 %v193
      %v266 = vunpack.c.l.b16 %v194
      %v267 = vunpack.c.l.b16 %v195
      %v268 = vunpack.c.l.b16 %v196
      %v269 = vunpack.c.l.b16 %v197
      %v270 = vunpack.c.l.b16 %v198
      %v271 = vunpack.c.l.b16 %v199
      %v272 = vunpack.c.l.b16 %v200
      %v273 = vunpack.c.l.b16 %v201
      %v274 = vunpack.c.l.b16 %v202
      %v275 = vunpack.c.l.b16 %v203
      %v276 = vunpack.c.l.b16 %v204
      %v277 = vunpack.c.l.b16 %v205
      %v278 = vunpack.c.l.b16 %v206
      %v279 = vpack.c.b16 %v248, %v247
      %v280 = vpack.c.b16 %v250, %v249
      %v281 = vpack.c.b16 %v252, %v251
      %v282 = vpack.c.b16 %v254, %v253
      %v283 = vpack.c.b16 %v256, %v255
      %v284 = vpack.c.b16 %v258, %v257
      %v285 = vpack.c.b16 %v260, %v259
      %v286 = vpack.c.b16 %v262, %v261
      %v287 = vpack.c.b16 %v264, %v263
      %v288 = vpack.c.b16 %v266, %v265
      %v289 = vpack.c.b16 %v268, %v267
      %v290 = vpack.c.b16 %v270, %v269
      %v291 = vpack.c.b16 %v272, %v271
      %v292 = vpack.c.b16 %v274, %v273
      %v293 = vpack.c.b16 %v276, %v275
      %v294 = vpack.c.b16 %v278, %v277
      %v299 = vunpack.c.l.b16 %v207
      %v300 = vunpack.c.l.b16 %v208
      %v301 = vunpack.c.l.b16 %v209
      %v302 = vunpack.c.l.b16 %v210
      %v303 = vpack.c.b16 %v300, %v299
      %v304 = vpack.c.b16 %v302, %v301
      %vm306 = vcmask 220160
      %v308 = vsel %vm306, %v279, 0
      %v311 = vsel %vm306, %v280, 0
      %v314 = vsel %vm306, %v281, 0
      %v317 = vsel %vm306, %v282, 0
      %v320 = vsel %vm306, %v283, 0
      %v323 = vsel %vm306, %v284, 0
      %v326 = vsel %vm306, %v285, 0
      %v329 = vsel %vm306, %v286, 0
      %v332 = vsel %vm306, %v287, 0
      %v335 = vsel %vm306, %v288, 0
      %v338 = vsel %vm306, %v289, 0
      %v341 = vsel %vm306, %v290, 0
      %v344 = vsel %vm306, %v291, 0
      %v347 = vsel %vm306, %v292, 0
      %v350 = vsel %vm306, %v293, 0
      %v353 = vsel %vm306, %v294, 0
      %vm355 = vcmask 1044480
      %vm356 = vcmask 1045504
      %v357 = vsel %vm355, 4294967295, 65535
      %v358 = vsel %vm356, %v357, 0
      %v360 = vand.u32 %v304, %v358
      %362 = vmatpush.bf16.msra.mxu0 0
      %363 = vmatpush.bf16.msra.mxu0 0
      %364 = vmatpush.bf16.msra.mxu0 0
      %365 = vmatpush.bf16.msra.mxu0 0
      %366 = vmatpush.bf16.msra.mxu0 0
      %367 = vmatpush.bf16.msra.mxu0 0
      %368 = vmatpush.bf16.msra.mxu0 %v360
      %369 = vmatpush.bf16.msra.mxu0 %v303
      %370 = vmatmul.bf16.gmra.mxu0 %v308
      %v371 = vpop.f32.mrf.mxu0
      %v372 = vadd.f32 %v213, %v371
      %v373 = vpop.f32.mrf.mxu0
      %v374 = vadd.f32 %v213, %v373
      %375 = vmatmul.bf16.gmra.mxu0 %v311
      %v376 = vpop.f32.mrf.mxu0
      %v377 = vadd.f32 %v213, %v376
      %v378 = vpop.f32.mrf.mxu0
      %v379 = vadd.f32 %v213, %v378
      %380 = vmatmul.bf16.gmra.mxu0 %v314
      %v381 = vpop.f32.mrf.mxu0
      %v382 = vadd.f32 %v213, %v381
      %v383 = vpop.f32.mrf.mxu0
      %v384 = vadd.f32 %v213, %v383
      %385 = vmatmul.bf16.gmra.mxu0 %v317
      %v386 = vpop.f32.mrf.mxu0
      %v387 = vadd.f32 %v213, %v386
      %v388 = vpop.f32.mrf.mxu0
      %v389 = vadd.f32 %v213, %v388
      %390 = vmatmul.bf16.gmra.mxu0 %v320
      %v391 = vpop.f32.mrf.mxu0
      %v392 = vadd.f32 %v213, %v391
      %v393 = vpop.f32.mrf.mxu0
      %v394 = vadd.f32 %v213, %v393
      %395 = vmatmul.bf16.gmra.mxu0 %v323
      %v396 = vpop.f32.mrf.mxu0
      %v397 = vadd.f32 %v213, %v396
      %v398 = vpop.f32.mrf.mxu0
      %v399 = vadd.f32 %v213, %v398
      %400 = vmatmul.bf16.gmra.mxu0 %v326
      %v401 = vpop.f32.mrf.mxu0
      %v402 = vadd.f32 %v213, %v401
      %v403 = vpop.f32.mrf.mxu0
      %v404 = vadd.f32 %v213, %v403
      %405 = vmatmul.bf16.gmra.mxu0 %v329
      %v406 = vpop.f32.mrf.mxu0
      %v407 = vadd.f32 %v213, %v406
      %v408 = vpop.f32.mrf.mxu0
      %v409 = vadd.f32 %v213, %v408
      %410 = vmatmul.bf16.gmra.mxu0 %v332
      %v411 = vpop.f32.mrf.mxu0
      %v412 = vadd.f32 %v213, %v411
      %v413 = vpop.f32.mrf.mxu0
      %v414 = vadd.f32 %v213, %v413
      %415 = vmatmul.bf16.gmra.mxu0 %v335
      %v416 = vpop.f32.mrf.mxu0
      %v417 = vadd.f32 %v213, %v416
      %v418 = vpop.f32.mrf.mxu0
      %v419 = vadd.f32 %v213, %v418
      %420 = vmatmul.bf16.gmra.mxu0 %v338
      %v421 = vpop.f32.mrf.mxu0
      %v422 = vadd.f32 %v213, %v421
      %v423 = vpop.f32.mrf.mxu0
      %v424 = vadd.f32 %v213, %v423
      %425 = vmatmul.bf16.gmra.mxu0 %v341
      %v426 = vpop.f32.mrf.mxu0
      %v427 = vadd.f32 %v213, %v426
      %v428 = vpop.f32.mrf.mxu0
      %v429 = vadd.f32 %v213, %v428
      %430 = vmatmul.bf16.gmra.mxu0 %v344
      %v431 = vpop.f32.mrf.mxu0
      %v432 = vadd.f32 %v213, %v431
      %v433 = vpop.f32.mrf.mxu0
      %v434 = vadd.f32 %v213, %v433
      %435 = vmatmul.bf16.gmra.mxu0 %v347
      %v436 = vpop.f32.mrf.mxu0
      %v437 = vadd.f32 %v213, %v436
      %v438 = vpop.f32.mrf.mxu0
      %v439 = vadd.f32 %v213, %v438
      %440 = vmatmul.bf16.gmra.mxu0 %v350
      %v441 = vpop.f32.mrf.mxu0
      %v442 = vadd.f32 %v213, %v441
      %v443 = vpop.f32.mrf.mxu0
      %v444 = vadd.f32 %v213, %v443
      %445 = vmatmul.bf16.gmra.mxu0 %v353
      %v446 = vpop.f32.mrf.mxu0
      %v447 = vadd.f32 %v213, %v446
      %v448 = vpop.f32.mrf.mxu0
      %v449 = vadd.f32 %v213, %v448
      %450 = vdwg.mxu0
      %v451 = vmax.f32 %v372, 0.0
      %v452 = vmax.f32 %v374, 0.0
      %v453 = vmax.f32 %v377, 0.0
      %v454 = vmax.f32 %v379, 0.0
      %v455 = vmax.f32 %v382, 0.0
      %v456 = vmax.f32 %v384, 0.0
      %v457 = vmax.f32 %v387, 0.0
      %v458 = vmax.f32 %v389, 0.0
      %v459 = vmax.f32 %v392, 0.0
      %v460 = vmax.f32 %v394, 0.0
      %v461 = vmax.f32 %v397, 0.0
      %v462 = vmax.f32 %v399, 0.0
      %v463 = vmax.f32 %v402, 0.0
      %v464 = vmax.f32 %v404, 0.0
      %v465 = vmax.f32 %v407, 0.0
      %v466 = vmax.f32 %v409, 0.0
      %v467 = vmax.f32 %v412, 0.0
      %v468 = vmax.f32 %v414, 0.0
      %v469 = vmax.f32 %v417, 0.0
      %v470 = vmax.f32 %v419, 0.0
      %v471 = vmax.f32 %v422, 0.0
      %v472 = vmax.f32 %v424, 0.0
      %v473 = vmax.f32 %v427, 0.0
      %v474 = vmax.f32 %v429, 0.0
      %v475 = vmax.f32 %v432, 0.0
      %v476 = vmax.f32 %v434, 0.0
      %v477 = vmax.f32 %v437, 0.0
      %v478 = vmax.f32 %v439, 0.0
      %v479 = vmax.f32 %v442, 0.0
      %v480 = vmax.f32 %v444, 0.0
      %v481 = vmax.f32 %v447, 0.0
      %v482 = vmax.f32 %v449, 0.0
      %v483 = vpack.c.bf16 %v451, %v451
      %v484 = vpack.c.bf16 %v452, %v452
      %v485 = vpack.c.bf16 %v453, %v453
      %v486 = vpack.c.bf16 %v454, %v454
      %v487 = vpack.c.bf16 %v455, %v455
      %v488 = vpack.c.bf16 %v456, %v456
      %v489 = vpack.c.bf16 %v457, %v457
      %v490 = vpack.c.bf16 %v458, %v458
      %v491 = vpack.c.bf16 %v459, %v459
      %v492 = vpack.c.bf16 %v460, %v460
      %v493 = vpack.c.bf16 %v461, %v461
      %v494 = vpack.c.bf16 %v462, %v462
      %v495 = vpack.c.bf16 %v463, %v463
      %v496 = vpack.c.bf16 %v464, %v464
      %v497 = vpack.c.bf16 %v465, %v465
      %v498 = vpack.c.bf16 %v466, %v466
      %v499 = vpack.c.bf16 %v467, %v467
      %v500 = vpack.c.bf16 %v468, %v468
      %v501 = vpack.c.bf16 %v469, %v469
      %v502 = vpack.c.bf16 %v470, %v470
      %v503 = vpack.c.bf16 %v471, %v471
      %v504 = vpack.c.bf16 %v472, %v472
      %v505 = vpack.c.bf16 %v473, %v473
      %v506 = vpack.c.bf16 %v474, %v474
      %v507 = vpack.c.bf16 %v475, %v475
      %v508 = vpack.c.bf16 %v476, %v476
      %v509 = vpack.c.bf16 %v477, %v477
      %v510 = vpack.c.bf16 %v478, %v478
      %v511 = vpack.c.bf16 %v479, %v479
      %v512 = vpack.c.bf16 %v480, %v480
      %v513 = vpack.c.bf16 %v481, %v481
      %v514 = vpack.c.bf16 %v482, %v482
      %vm515 = vcmask 60416
      %516 = vst.msk [vmem:[%s172] sm:$0xf] %vm515, %v483
      %517 = vst.msk [vmem:[%s172 + $0x4] sm:$0xf] %vm515, %v484
      %518 = vst.msk [vmem:[%s172 + $0x8] sm:$0xf] %vm515, %v485
      %519 = vst.msk [vmem:[%s172 + $0xc] sm:$0xf] %vm515, %v486
      %520 = vst.msk [vmem:[%s172 + $0x10] sm:$0xf] %vm515, %v487
      %521 = vst.msk [vmem:[%s172 + $0x14] sm:$0xf] %vm515, %v488
      %522 = vst.msk [vmem:[%s172 + $0x18] sm:$0xf] %vm515, %v489
      %523 = vst.msk [vmem:[%s172 + $0x1c] sm:$0xf] %vm515, %v490
      %524 = vst.msk [vmem:[%s172 + $0x20] sm:$0xf] %vm515, %v491
      %525 = vst.msk [vmem:[%s172 + $0x24] sm:$0xf] %vm515, %v492
      %526 = vst.msk [vmem:[%s172 + $0x28] sm:$0xf] %vm515, %v493
      %527 = vst.msk [vmem:[%s172 + $0x2c] sm:$0xf] %vm515, %v494
      %528 = vst.msk [vmem:[%s172 + $0x30] sm:$0xf] %vm515, %v495
      %529 = vst.msk [vmem:[%s172 + $0x34] sm:$0xf] %vm515, %v496
      %530 = vst.msk [vmem:[%s172 + $0x38] sm:$0xf] %vm515, %v497
      %531 = vst.msk [vmem:[%s172 + $0x3c] sm:$0xf] %vm515, %v498
      %532 = vst.msk [vmem:[%s172 + $0x40] sm:$0xf] %vm515, %v499
      %533 = vst.msk [vmem:[%s172 + $0x44] sm:$0xf] %vm515, %v500
      %534 = vst.msk [vmem:[%s172 + $0x48] sm:$0xf] %vm515, %v501
      %535 = vst.msk [vmem:[%s172 + $0x4c] sm:$0xf] %vm515, %v502
      %536 = vst.msk [vmem:[%s172 + $0x50] sm:$0xf] %vm515, %v503
      %537 = vst.msk [vmem:[%s172 + $0x54] sm:$0xf] %vm515, %v504
      %538 = vst.msk [vmem:[%s172 + $0x58] sm:$0xf] %vm515, %v505
      %539 = vst.msk [vmem:[%s172 + $0x5c] sm:$0xf] %vm515, %v506
      %540 = vst.msk [vmem:[%s172 + $0x60] sm:$0xf] %vm515, %v507
      %541 = vst.msk [vmem:[%s172 + $0x64] sm:$0xf] %vm515, %v508
      %542 = vst.msk [vmem:[%s172 + $0x68] sm:$0xf] %vm515, %v509
      %543 = vst.msk [vmem:[%s172 + $0x6c] sm:$0xf] %vm515, %v510
      %544 = vst.msk [vmem:[%s172 + $0x70] sm:$0xf] %vm515, %v511
      %545 = vst.msk [vmem:[%s172 + $0x74] sm:$0xf] %vm515, %v512
      %546 = vst.msk [vmem:[%s172 + $0x78] sm:$0xf] %vm515, %v513
      %547 = vst.msk [vmem:[%s172 + $0x7c] sm:$0xf] %vm515, %v514
      %s548 = smul.u32 32, %s14
      %p549 = scmp.lt.s32.totalorder %s548, 63
      %s550 = scalar_select %p549, %s548, 63
      %s551 = smul.addr %s550, 4
      %s552 = scalar_lea.vmem %s3, %s551
      // Predicated region
      $region33: #{tpu_custom_call.1} parent=31 // pred_check
        %p553 = pneg %p100
      $region34: #{tpu_custom_call.1} parent=31 // pred_check_branch
        %555 = sbr.rel (%p553) target = $region36
      $region35: #{tpu_custom_call.1} parent=31 // pred_region
        %s556 = smul.u32 32, %s14
      $region36: #{tpu_custom_call.1} parent=31 // pred_fallthru
        _
    $region32: #{tpu_custom_call.1} parent=5 // pred_fallthru
      _
    %p557 = scmp.le.s32.totalorder 2, %s9
    // Predicated region
    $region37: #{tpu_custom_call.1} parent=5 // pred_check
      %p558 = pneg %p557
    $region38: #{tpu_custom_call.1} parent=5 // pred_check_branch
      %560 = sbr.rel (%p558) target = $region40
    $region39: #{tpu_custom_call.1} parent=5 // pred_region
      %s561 = ssub.s32 %s9, 2
      // Predicated region
      $region41: #{tpu_custom_call.1} parent=39 // pred_check
        %p562 = pneg %p106
      $region42: #{tpu_custom_call.1} parent=39 // pred_check_branch
        %564 = sbr.rel (%p562) target = $region44
      $region43: #{tpu_custom_call.1} parent=39 // pred_region
        %s565 = smul.u32 32, %s15
        %p566 = scmp.lt.s32.totalorder %s565, 63
        %s567 = scalar_select %p566, %s565, 63
        %s568 = smul.addr %s567, 4
        %s569 = scalar_lea.vmem %s3, %s568
      $region44: #{tpu_custom_call.1} parent=39 // pred_fallthru
        _
    $region40: #{tpu_custom_call.1} parent=5 // pred_fallthru
      _
  $region6: #{tpu_custom_call.1} parent=0 // loop_footer
    %s13 = sadd.s32 1, %s9
  $region7: #{tpu_custom_call.1} parent=0 // loop_footer_branch
    %8 = sbr.rel target = $region3
  $region8: #{tpu_custom_call.1} parent=0 // loop_exit
    _

</llo_original>
